<compile_context>
chip_gen: v7x
topology: tpu7x:2x2x1
jax: 0.10.0
libtpu: 0.0.40
codegen_flags: <defaults>
</compile_context>

<pallas_src>
import functools

import jax
import jax.numpy as jnp
from jax.experimental import pallas as pl
from jax.experimental.pallas import tpu as pltpu

_HID = 32  # padded internal width (>= widest hidden layer, 20)


def _round_up(n, m):
    return ((n + m - 1) // m) * m


@functools.lru_cache(maxsize=None)
def _vmem_limit_and_row_cap():
    """Return (vmem_limit_bytes, max rows per batch tile), lane-padding aware."""
    try:
        phys = int(pltpu.get_tpu_info().vmem_capacity_bytes)
    except Exception:
        phys = 64 * 1024 * 1024          # conservative fallback (v7x-sized)
    vmem_limit = min(phys * 3 // 4, 96 * 1024 * 1024)
    # ~4.5 KiB of VMEM per batch row: x tile (3 bufs) + out tile (2 bufs),
    # both lane-padded 32/2 -> 128 lanes, plus fused-MLP intermediates.
    bytes_per_row = 4608
    row_cap = max(8, (vmem_limit * 3 // 4) // bytes_per_row // 8 * 8)
    return vmem_limit, row_cap


@functools.lru_cache(maxsize=None)
def _dual_tensorcore():
    """True on parts with 2 TensorCores per chip (megacore / v7x)."""
    try:
        kind = jax.devices()[0].device_kind.lower()
    except Exception:
        return False
    return any(t in kind for t in ("v4", "v5p", "v7", "7x"))


def mlp_kernel(x_ref, w1_ref, wrest_ref, b_ref, o_ref):
    # b_ref row i = bias of layer i+1, zero-padded to _HID lanes.
    b1 = b_ref[0:1, :]
    b2 = b_ref[1:2, :]
    b3 = b_ref[2:3, :]
    b4 = b_ref[3:4, :]

    # Layer 1: Linear(in_dim, 2) + ReLU   (cols 2.._HID-1 stay exactly 0)
    h = jnp.dot(x_ref[...], w1_ref[...],
                preferred_element_type=jnp.float32) + b1
    h = jnp.maximum(h, 0.0)
    # Layer 2: Linear(2, 20) + ReLU
    h = jnp.dot(h, wrest_ref[0], preferred_element_type=jnp.float32) + b2
    h = jnp.maximum(h, 0.0)
    # Layer 3: Linear(20, 3) + ReLU
    h = jnp.dot(h, wrest_ref[1], preferred_element_type=jnp.float32) + b3
    h = jnp.maximum(h, 0.0)
    # Layer 4: Linear(3, 2)  (no activation -- forward() returns raw logits)
    h = jnp.dot(h, wrest_ref[2], preferred_element_type=jnp.float32) + b4
    o_ref[...] = h[:, : o_ref.shape[1]].astype(o_ref.dtype)


@functools.partial(jax.jit, static_argnames=("block_b",))
def model02_forward(x, params, block_b=None):
    """params = ((w1,b1),(w2,b2),(w3,b3),(w4,b4)); wi: (din, dout), bi: (1, dout)."""
    (w1, b1), (w2, b2), (w3, b3), (w4, b4) = params
    B, in_dim = x.shape
    out_dim = w4.shape[1]

    # ---- pack the 8 constant operands into 3 (zero-padded, semantics kept) ----
    def pad2(a, rows, cols):
        return jnp.pad(a, ((0, rows - a.shape[0]), (0, cols - a.shape[1])))

    w1p = pad2(w1, in_dim, _HID)                                  # (in_dim, 32)
    wrest = jnp.stack([pad2(w2, _HID, _HID),
                       pad2(w3, _HID, _HID),
                       pad2(w4, _HID, _HID)])                     # (3, 32, 32)
    ball = jnp.concatenate([pad2(b1, 1, _HID), pad2(b2, 1, _HID),
                            pad2(b3, 1, _HID), pad2(b4, 1, _HID)],
                           axis=0)                                # (4, 32)

    # ---- tile picker: generation-aware cap, no double limiting ----
    vmem_limit, row_cap = _vmem_limit_and_row_cap()
    bb_cap = row_cap if block_b is None else max(8, min(_round_up(block_b, 8),
                                                        row_cap))
    bp8 = _round_up(max(B, 1), 8)
    nsteps = -(-bp8 // bb_cap)
    # Megacore-only split: a single step leaves the 2nd TC idle, but halving is
    # only worth it when each half keeps >= ~2048 rows of real work.
    if nsteps == 1 and bp8 >= 4096 and _dual_tensorcore():
        nsteps = 2
    bb = _round_up(-(-bp8 // nsteps), 8)
    Bp = bb * nsteps

    if Bp != B:
        x = jnp.pad(x, ((0, Bp - B), (0, 0)))

    # Deeper input buffering once there are enough steps for it to matter.
    if nsteps >= 3:
        try:
            x_spec = pl.BlockSpec((bb, in_dim), lambda i: (i, 0),
                                  pipeline_mode=pl.Buffered(3))
        except TypeError:  # older BlockSpec signature
            x_spec = pl.BlockSpec((bb, in_dim), lambda i: (i, 0))
    else:
        x_spec = pl.BlockSpec((bb, in_dim), lambda i: (i, 0))

    cost = pl.CostEstimate(
        flops=2 * Bp * (in_dim * _HID + 3 * _HID * _HID),
        transcendentals=0,
        bytes_accessed=4 * (Bp * (in_dim + out_dim)
                            + in_dim * _HID + 3 * _HID * _HID + 4 * _HID))

    out = pl.pallas_call(
        mlp_kernel,
        out_shape=jax.ShapeDtypeStruct((Bp, out_dim), x.dtype),
        grid_spec=pl.GridSpec(
            grid=(nsteps,),
            in_specs=[
                x_spec,                                             # x tile
                pl.BlockSpec((in_dim, _HID), lambda i: (0, 0)),     # w1 (const)
                pl.BlockSpec((3, _HID, _HID), lambda i: (0, 0, 0)), # w2..w4
                pl.BlockSpec((4, _HID), lambda i: (0, 0)),          # biases
            ],
            # NOTE: the (bb, 2) out block is lane-sparse (2/128 lanes); store
            # count is tiny and its 512 B/row VMEM cost is in the budget above.
            out_specs=pl.BlockSpec((bb, out_dim), lambda i: (i, 0)),
        ),
        compiler_params=pltpu.CompilerParams(
            dimension_semantics=("parallel",),
            vmem_limit_bytes=vmem_limit),
        cost_estimate=cost,
    )(x, w1p, wrest, ball)
    return out[:B]


def init_params(key, in_dim):
    """Deterministic init mimicking nn.Linear (uniform +-1/sqrt(fan_in))."""
    dims = [(in_dim, 2), (2, 20), (20, 3), (3, 2)]
    params = []
    for (din, dout) in dims:
        key, kw, kb = jax.random.split(key, 3)
        bound = 1.0 / jnp.sqrt(jnp.float32(din))
        w = jax.random.uniform(kw, (din, dout), jnp.float32, -bound, bound)
        b = jax.random.uniform(kb, (1, dout), jnp.float32, -bound, bound)
        params.append((w, b))
    return tuple(params)


def reference_forward(x, params):
    h = x
    for i, (w, b) in enumerate(params):
        h = h @ w + b
        if i < 3:
            h = jnp.maximum(h, 0.0)
    return h


if __name__ == "__main__":
    key = jax.random.PRNGKey(0)
    in_dim = 32
    batch = 16

    kx, kp = jax.random.split(key)
    x = jax.random.normal(kx, (batch, in_dim), jnp.float32)
    params = init_params(kp, in_dim)

    out = model02_forward(x, params)
    out = jax.block_until_ready(out)
    ref = reference_forward(x, params)
    assert out.shape == (batch, 2)
    assert jnp.allclose(out, ref, atol=1e-5, rtol=1e-5), "mismatch vs reference"

    # Ragged batch exercises the padding / single-step fast path as well.
    x2 = jax.random.normal(kx, (100, in_dim), jnp.float32)
    out2 = jax.block_until_ready(model02_forward(x2, params))
    ref2 = reference_forward(x2, params)
    assert out2.shape == (100, 2)
    assert jnp.allclose(out2, ref2, atol=1e-5, rtol=1e-5), "mismatch (ragged)"

    print("KERNEL_OK")
</pallas_src>

<mosaic_0001>
module attributes {stable_mosaic.version = 11 : i64} {
  func.func @mlp_kernel(%arg0: i32, %arg1: memref<16x32xf32, #tpu.memory_space<vmem>>, %arg2: memref<32x32xf32, #tpu.memory_space<vmem>>, %arg3: memref<3x32x32xf32, #tpu.memory_space<vmem>>, %arg4: memref<4x32xf32, #tpu.memory_space<vmem>>, %arg5: memref<16x2xf32, #tpu.memory_space<vmem>>) attributes {dimension_semantics = [#tpu.dimension_semantics<parallel>], iteration_bounds = array<i64: 1>, scalar_prefetch = 0 : i64, scratch_operands = 0 : i64, tpu.core_type = #tpu.core_type<tc>, window_params = [{transform_indices = @transform_0, window_bounds = array<i64: 16, 32>}, {pipeline_mode = #tpu.pipeline_mode<synchronous>, transform_indices = @transform_1, window_bounds = array<i64: 32, 32>}, {pipeline_mode = #tpu.pipeline_mode<synchronous>, transform_indices = @transform_2, window_bounds = array<i64: 3, 32, 32>}, {pipeline_mode = #tpu.pipeline_mode<synchronous>, transform_indices = @transform_3, window_bounds = array<i64: 4, 32>}, {transform_indices = @transform_4, window_bounds = array<i64: 16, 2>}]} {
    %c0 = arith.constant 0 : index
    %c0_0 = arith.constant 0 : index
    %0 = vector.load %arg4[%c0, %c0_0] : memref<4x32xf32, #tpu.memory_space<vmem>>, vector<1x32xf32>
    %c1 = arith.constant 1 : index
    %c0_1 = arith.constant 0 : index
    %1 = vector.load %arg4[%c1, %c0_1] : memref<4x32xf32, #tpu.memory_space<vmem>>, vector<1x32xf32>
    %c2 = arith.constant 2 : index
    %c0_2 = arith.constant 0 : index
    %2 = vector.load %arg4[%c2, %c0_2] : memref<4x32xf32, #tpu.memory_space<vmem>>, vector<1x32xf32>
    %c3 = arith.constant 3 : index
    %c0_3 = arith.constant 0 : index
    %3 = vector.load %arg4[%c3, %c0_3] : memref<4x32xf32, #tpu.memory_space<vmem>>, vector<1x32xf32>
    %c0_4 = arith.constant 0 : index
    %c0_5 = arith.constant 0 : index
    %4 = vector.load %arg1[%c0_4, %c0_5] : memref<16x32xf32, #tpu.memory_space<vmem>>, vector<16x32xf32>
    %c0_6 = arith.constant 0 : index
    %c0_7 = arith.constant 0 : index
    %5 = vector.load %arg2[%c0_6, %c0_7] : memref<32x32xf32, #tpu.memory_space<vmem>>, vector<32x32xf32>
    %cst = arith.constant dense<0.000000e+00> : vector<16x32xf32>
    %6 = tpu.matmul %4, %5, %cst {dimension_numbers = #tpu.dot_dimension_numbers<[1], [0], [0], [1], [0, 0, 1, 1], [], []>} : vector<16x32xf32>, vector<32x32xf32>, vector<16x32xf32> -> vector<16x32xf32>
    %7 = vector.broadcast %0 : vector<1x32xf32> to vector<16x32xf32>
    %8 = arith.addf %6, %7 : vector<16x32xf32>
    %cst_8 = arith.constant 0.000000e+00 : f32
    %9 = vector.broadcast %cst_8 : f32 to vector<16x32xf32>
    %10 = arith.maximumf %8, %9 : vector<16x32xf32>
    %c0_9 = arith.constant 0 : index
    %c0_10 = arith.constant 0 : index
    %c0_11 = arith.constant 0 : index
    %11 = vector.load %arg3[%c0_9, %c0_10, %c0_11] : memref<3x32x32xf32, #tpu.memory_space<vmem>>, vector<1x32x32xf32>
    %12 = vector.shape_cast %11 : vector<1x32x32xf32> to vector<32x32xf32>
    %cst_12 = arith.constant dense<0.000000e+00> : vector<16x32xf32>
    %13 = tpu.matmul %10, %12, %cst_12 {dimension_numbers = #tpu.dot_dimension_numbers<[1], [0], [0], [1], [0, 0, 1, 1], [], []>} : vector<16x32xf32>, vector<32x32xf32>, vector<16x32xf32> -> vector<16x32xf32>
    %14 = vector.broadcast %1 : vector<1x32xf32> to vector<16x32xf32>
    %15 = arith.addf %13, %14 : vector<16x32xf32>
    %cst_13 = arith.constant 0.000000e+00 : f32
    %16 = vector.broadcast %cst_13 : f32 to vector<16x32xf32>
    %17 = arith.maximumf %15, %16 : vector<16x32xf32>
    %c1_14 = arith.constant 1 : index
    %c0_15 = arith.constant 0 : index
    %c0_16 = arith.constant 0 : index
    %18 = vector.load %arg3[%c1_14, %c0_15, %c0_16] : memref<3x32x32xf32, #tpu.memory_space<vmem>>, vector<1x32x32xf32>
    %19 = vector.shape_cast %18 : vector<1x32x32xf32> to vector<32x32xf32>
    %cst_17 = arith.constant dense<0.000000e+00> : vector<16x32xf32>
    %20 = tpu.matmul %17, %19, %cst_17 {dimension_numbers = #tpu.dot_dimension_numbers<[1], [0], [0], [1], [0, 0, 1, 1], [], []>} : vector<16x32xf32>, vector<32x32xf32>, vector<16x32xf32> -> vector<16x32xf32>
    %21 = vector.broadcast %2 : vector<1x32xf32> to vector<16x32xf32>
    %22 = arith.addf %20, %21 : vector<16x32xf32>
    %cst_18 = arith.constant 0.000000e+00 : f32
    %23 = vector.broadcast %cst_18 : f32 to vector<16x32xf32>
    %24 = arith.maximumf %22, %23 : vector<16x32xf32>
    %c2_19 = arith.constant 2 : index
    %c0_20 = arith.constant 0 : index
    %c0_21 = arith.constant 0 : index
    %25 = vector.load %arg3[%c2_19, %c0_20, %c0_21] : memref<3x32x32xf32, #tpu.memory_space<vmem>>, vector<1x32x32xf32>
    %26 = vector.shape_cast %25 : vector<1x32x32xf32> to vector<32x32xf32>
    %cst_22 = arith.constant dense<0.000000e+00> : vector<16x32xf32>
    %27 = tpu.matmul %24, %26, %cst_22 {dimension_numbers = #tpu.dot_dimension_numbers<[1], [0], [0], [1], [0, 0, 1, 1], [], []>} : vector<16x32xf32>, vector<32x32xf32>, vector<16x32xf32> -> vector<16x32xf32>
    %28 = vector.broadcast %3 : vector<1x32xf32> to vector<16x32xf32>
    %29 = arith.addf %27, %28 : vector<16x32xf32>
    %30 = vector.extract_strided_slice %29 {offsets = [0, 0], sizes = [16, 2], strides = [1, 1]} : vector<16x32xf32> to vector<16x2xf32>
    %c0_23 = arith.constant 0 : index
    %c0_24 = arith.constant 0 : index
    %31 = vector.load %arg5[%c0_23, %c0_24] : memref<16x2xf32, #tpu.memory_space<vmem>>, vector<16x2xf32>
    tpu.vector_store %arg5[%c0_23, %c0_24], %30 {strides = array<i32>} : memref<16x2xf32, #tpu.memory_space<vmem>>, vector<16x2xf32>,
    return
  }
  func.func @transform_0(%arg0: i32) -> (i32, i32) {
    %c0_i32 = arith.constant 0 : i32
    %c0_i32_0 = arith.constant 0 : i32
    return %arg0, %c0_i32 : i32, i32
  }
  func.func @transform_1(%arg0: i32) -> (i32, i32) {
    %c0_i32 = arith.constant 0 : i32
    %c0_i32_0 = arith.constant 0 : i32
    %c0_i32_1 = arith.constant 0 : i32
    return %c0_i32, %c0_i32_0 : i32, i32
  }
  func.func @transform_2(%arg0: i32) -> (i32, i32, i32) {
    %c0_i32 = arith.constant 0 : i32
    %c0_i32_0 = arith.constant 0 : i32
    %c0_i32_1 = arith.constant 0 : i32
    %c0_i32_2 = arith.constant 0 : i32
    return %c0_i32, %c0_i32_0, %c0_i32_1 : i32, i32, i32
  }
  func.func @transform_3(%arg0: i32) -> (i32, i32) {
    %c0_i32 = arith.constant 0 : i32
    %c0_i32_0 = arith.constant 0 : i32
    %c0_i32_1 = arith.constant 0 : i32
    return %c0_i32, %c0_i32_0 : i32, i32
  }
  func.func @transform_4(%arg0: i32) -> (i32, i32) {
    %c0_i32 = arith.constant 0 : i32
    %c0_i32_0 = arith.constant 0 : i32
    return %arg0, %c0_i32 : i32, i32
  }
}

</mosaic_0001>

<llo_original>
// kernel: model02_forward.1
$region0: #{model02_forward.1}
  #allocation0 [shape = 'u32[]', space=smem, size = 0x4, offset = 0x4, fixed_abs, tag = 'smem constant byte address 0x4 - core index']
  #allocation1 [shape = 'u32[144,128]{1,0:T(1,128)}', space=vmem, size = 0x12000, scoped, tag = 'internal scratch']
  %s0 = inlined_call_operand.vmem [shape: f32[16,32], index: 0, kind: input, shape index: {}]
  %s1 = inlined_call_operand.vmem [shape: f32[32,32], index: 1, kind: input, shape index: {}]
  %s2 = inlined_call_operand.vmem [shape: f32[3,32,32], index: 2, kind: input, shape index: {}]
  %s3 = inlined_call_operand.vmem [shape: f32[4,32], index: 3, kind: input, shape index: {}]
  %s4 = inlined_call_operand.vmem [shape: f32[16,2], index: 4, kind: output, shape index: {}]
  %s5 = sld [smem:[#allocation0]]
  $region26: #{model02_forward.1} parent=0
    _
  %s7 = ssub.s32 1, %s5
  %s8 = scalar_select 0, %s7, %s5
  // Predicated region
  $region2: #{model02_forward.1} parent=0 // pred_check
    _
  $region3: #{model02_forward.1} parent=0 // pred_check_branch
    %10 = sbr.rel (0) target = $region5
  $region4: #{model02_forward.1} parent=0 // pred_region
    _
  $region5: #{model02_forward.1} parent=0 // pred_fallthru
    _
  // Predicated region
  $region6: #{model02_forward.1} parent=0 // pred_check
    _
  $region7: #{model02_forward.1} parent=0 // pred_check_branch
    %12 = sbr.rel (0) target = $region9
  $region8: #{model02_forward.1} parent=0 // pred_region
    _
  $region9: #{model02_forward.1} parent=0 // pred_fallthru
    _
  // Predicated region
  $region10: #{model02_forward.1} parent=0 // pred_check
    _
  $region11: #{model02_forward.1} parent=0 // pred_check_branch
    %14 = sbr.rel (0) target = $region13
  $region12: #{model02_forward.1} parent=0 // pred_region
    _
  $region13: #{model02_forward.1} parent=0 // pred_fallthru
    _
  // Predicated region
  $region14: #{model02_forward.1} parent=0 // pred_check
    _
  $region15: #{model02_forward.1} parent=0 // pred_check_branch
    %16 = sbr.rel (0) target = $region17
  $region16: #{model02_forward.1} parent=0 // pred_region
    _
  $region17: #{model02_forward.1} parent=0 // pred_fallthru
    _
  %v17 = vld [vmem:[%s3] sm:$0x1]
  %v18 = vld [vmem:[%s3 + $0x1] sm:$0x1]
  %v19 = vld [vmem:[%s3 + $0x2] sm:$0x1]
  %v20 = vld [vmem:[%s3 + $0x3] sm:$0x1]
  %v21 = vld [vmem:[%s0] sm:$0xff]
  %v22 = vld [vmem:[%s0 + $0x8] sm:$0xff]
  %v23 = vld [vmem:[%s1] sm:$0xff]
  %v24 = vld [vmem:[%s1 + $0x8] sm:$0xff]
  %v25 = vld [vmem:[%s1 + $0x10] sm:$0xff]
  %v26 = vld [vmem:[%s1 + $0x18] sm:$0xff]
  %v27 = vlaneseq
  %v28 = vshrl.u32 %v27, 7
  %v29 = vsub.s32 0, %v28
  %v30 = vrot.slane %v17, %v29
  %vm31 = vcmask 261120
  %v33 = vsel %vm31, %v21, 0
  %v36 = vsel %vm31, %v22, 0
  %38 = vmatprep.subr.mxu0 0.0
  %39 = vmatpush1.msra.mxu0 %v23
  %40 = vmatprep.subr.mxu0 0.0
  %41 = vmatpush1.msra.mxu0 %v24
  %42 = vmatprep.subr.mxu0 0.0
  %43 = vmatpush1.msra.mxu0 %v25
  %44 = vmatprep.subr.mxu0 0.0
  %45 = vmatpush1.msra.mxu0 %v26
  %46 = vmatprep.subr.mxu0 0.0
  %47 = vmatpush1.msra.mxu0 0.0
  %48 = vmatprep.subr.mxu0 0.0
  %49 = vmatpush1.msra.mxu0 0.0
  %50 = vmatprep.subr.mxu0 0.0
  %51 = vmatpush1.msra.mxu0 0.0
  %52 = vmatprep.subr.mxu0 0.0
  %53 = vmatpush1.msra.mxu0 0.0
  %54 = vmatprep.subr.mxu0 0.0
  %55 = vmatpush1.msra.mxu0 0.0
  %56 = vmatprep.subr.mxu0 0.0
  %57 = vmatpush1.msra.mxu0 0.0
  %58 = vmatprep.subr.mxu0 0.0
  %59 = vmatpush1.msra.mxu0 0.0
  %60 = vmatprep.subr.mxu0 0.0
  %61 = vmatpush1.msra.mxu0 0.0
  %62 = vmatprep.subr.mxu0 0.0
  %63 = vmatpush1.msra.mxu0 0.0
  %64 = vmatprep.subr.mxu0 0.0
  %65 = vmatpush1.msra.mxu0 0.0
  %66 = vmatprep.subr.mxu0 0.0
  %67 = vmatpush1.msra.mxu0 0.0
  %68 = vmatprep.subr.mxu0 0.0
  %69 = vmatpush1.msra.mxu0 0.0
  %70 = vmatprep.subr.mxu0 0.0
  %71 = vmatpush1.msra.mxu0 0.0
  %72 = vmatprep.subr.mxu0 0.0
  %73 = vmatpush1.msra.mxu0 0.0
  %74 = vmatprep.subr.mxu0 0.0
  %75 = vmatpush1.msra.mxu0 0.0
  %76 = vmatprep.subr.mxu0 0.0
  %77 = vmatpush1.msra.mxu0 0.0
  %78 = vmatprep.subr.mxu0 0.0
  %79 = vmatpush1.msra.mxu0 0.0
  %80 = vmatprep.subr.mxu0 0.0
  %81 = vmatpush1.msra.mxu0 0.0
  %82 = vmatprep.subr.mxu0 0.0
  %83 = vmatpush1.msra.mxu0 0.0
  %84 = vmatprep.subr.mxu0 0.0
  %85 = vmatpush1.msra.mxu0 0.0
  %86 = vmatprep.subr.mxu0 0.0
  %87 = vmatpush1.msra.mxu0 0.0
  %88 = vmatprep.subr.mxu0 0.0
  %89 = vmatpush1.msra.mxu0 0.0
  %90 = vmatprep.subr.mxu0 0.0
  %91 = vmatpush1.msra.mxu0 0.0
  %92 = vmatprep.subr.mxu0 0.0
  %93 = vmatpush1.msra.mxu0 0.0
  %94 = vmatprep.subr.mxu0 0.0
  %95 = vmatpush1.msra.mxu0 0.0
  %96 = vmatprep.subr.mxu0 0.0
  %97 = vmatpush1.msra.mxu0 0.0
  %98 = vmatprep.subr.mxu0 0.0
  %99 = vmatpush1.msra.mxu0 0.0
  %100 = vmatprep.subr.mxu0 0.0
  %101 = vmatpush1.msra.mxu0 0.0
  %102 = vmatprep.mubr.f32.mxu0 0.0
  %103 = vmatmul.mubr.f32.gmra.mrb[0].mxu0 %v33
  %v104 = vpop.f32.mrb[0].mxu0
  %v105 = vadd.f32 %v30, %v104
  %v106 = vpop.f32.mrb[0].mxu0
  %107 = vmatprep.mubr.f32.mxu0 0.0
  %108 = vmatmul.mubr.f32.gmra.mrb[0].mxu0 %v36
  %v109 = vpop.f32.mrb[0].mxu0
  %v110 = vadd.f32 %v30, %v109
  %v111 = vpop.f32.mrb[0].mxu0
  %112 = vdwg.mxu0
  %v113 = vmax.f32 %v105, 0.0
  %v114 = vmax.f32 %v110, 0.0
  %v115 = vld [vmem:[%s2] sm:$0xff]
  %v116 = vld [vmem:[%s2 + $0x8] sm:$0xff]
  %v117 = vld [vmem:[%s2 + $0x10] sm:$0xff]
  %v118 = vld [vmem:[%s2 + $0x18] sm:$0xff]
  %v119 = vlaneseq
  %v120 = vshrl.u32 %v119, 7
  %v121 = vsub.s32 0, %v120
  %v122 = vrot.slane %v18, %v121
  %v124 = vsel %vm31, %v113, 0
  %v127 = vsel %vm31, %v114, 0
  %129 = vmatprep.subr.mxu0 0.0
  %130 = vmatpush1.msra.mxu0 %v115
  %131 = vmatprep.subr.mxu0 0.0
  %132 = vmatpush1.msra.mxu0 %v116
  %133 = vmatprep.subr.mxu0 0.0
  %134 = vmatpush1.msra.mxu0 %v117
  %135 = vmatprep.subr.mxu0 0.0
  %136 = vmatpush1.msra.mxu0 %v118
  %137 = vmatprep.subr.mxu0 0.0
  %138 = vmatpush1.msra.mxu0 0.0
  %139 = vmatprep.subr.mxu0 0.0
  %140 = vmatpush1.msra.mxu0 0.0
  %141 = vmatprep.subr.mxu0 0.0
  %142 = vmatpush1.msra.mxu0 0.0
  %143 = vmatprep.subr.mxu0 0.0
  %144 = vmatpush1.msra.mxu0 0.0
  %145 = vmatprep.subr.mxu0 0.0
  %146 = vmatpush1.msra.mxu0 0.0
  %147 = vmatprep.subr.mxu0 0.0
  %148 = vmatpush1.msra.mxu0 0.0
  %149 = vmatprep.subr.mxu0 0.0
  %150 = vmatpush1.msra.mxu0 0.0
  %151 = vmatprep.subr.mxu0 0.0
  %152 = vmatpush1.msra.mxu0 0.0
  %153 = vmatprep.subr.mxu0 0.0
  %154 = vmatpush1.msra.mxu0 0.0
  %155 = vmatprep.subr.mxu0 0.0
  %156 = vmatpush1.msra.mxu0 0.0
  %157 = vmatprep.subr.mxu0 0.0
  %158 = vmatpush1.msra.mxu0 0.0
  %159 = vmatprep.subr.mxu0 0.0
  %160 = vmatpush1.msra.mxu0 0.0
  %161 = vmatprep.subr.mxu0 0.0
  %162 = vmatpush1.msra.mxu0 0.0
  %163 = vmatprep.subr.mxu0 0.0
  %164 = vmatpush1.msra.mxu0 0.0
  %165 = vmatprep.subr.mxu0 0.0
  %166 = vmatpush1.msra.mxu0 0.0
  %167 = vmatprep.subr.mxu0 0.0
  %168 = vmatpush1.msra.mxu0 0.0
  %169 = vmatprep.subr.mxu0 0.0
  %170 = vmatpush1.msra.mxu0 0.0
  %171 = vmatprep.subr.mxu0 0.0
  %172 = vmatpush1.msra.mxu0 0.0
  %173 = vmatprep.subr.mxu0 0.0
  %174 = vmatpush1.msra.mxu0 0.0
  %175 = vmatprep.subr.mxu0 0.0
  %176 = vmatpush1.msra.mxu0 0.0
  %177 = vmatprep.subr.mxu0 0.0
  %178 = vmatpush1.msra.mxu0 0.0
  %179 = vmatprep.subr.mxu0 0.0
  %180 = vmatpush1.msra.mxu0 0.0
  %181 = vmatprep.subr.mxu0 0.0
  %182 = vmatpush1.msra.mxu0 0.0
  %183 = vmatprep.subr.mxu0 0.0
  %184 = vmatpush1.msra.mxu0 0.0
  %185 = vmatprep.subr.mxu0 0.0
  %186 = vmatpush1.msra.mxu0 0.0
  %187 = vmatprep.subr.mxu0 0.0
  %188 = vmatpush1.msra.mxu0 0.0
  %189 = vmatprep.subr.mxu0 0.0
  %190 = vmatpush1.msra.mxu0 0.0
  %191 = vmatprep.subr.mxu0 0.0
  %192 = vmatpush1.msra.mxu0 0.0
  %193 = vmatprep.mubr.f32.mxu0 0.0
  %194 = vmatmul.mubr.f32.gmra.mrb[0].mxu0 %v124
  %v195 = vpop.f32.mrb[0].mxu0
  %v196 = vadd.f32 %v122, %v195
  %v197 = vpop.f32.mrb[0].mxu0
  %198 = vmatprep.mubr.f32.mxu0 0.0
  %199 = vmatmul.mubr.f32.gmra.mrb[0].mxu0 %v127
  %v200 = vpop.f32.mrb[0].mxu0
  %v201 = vadd.f32 %v122, %v200
  %v202 = vpop.f32.mrb[0].mxu0
  %203 = vdwg.mxu0
  %v204 = vmax.f32 %v196, 0.0
  %v205 = vmax.f32 %v201, 0.0
  %s206 = scalar_lea.vmem %s2, 32
  %v207 = vld [vmem:[%s206] sm:$0xff]
  %v208 = vld [vmem:[%s206 + $0x8] sm:$0xff]
  %v209 = vld [vmem:[%s206 + $0x10] sm:$0xff]
  %v210 = vld [vmem:[%s206 + $0x18] sm:$0xff]
  %v211 = vlaneseq
  %v212 = vshrl.u32 %v211, 7
  %v213 = vsub.s32 0, %v212
  %v214 = vrot.slane %v19, %v213
  %v216 = vsel %vm31, %v204, 0
  %v219 = vsel %vm31, %v205, 0
  %221 = vmatprep.subr.mxu0 0.0
  %222 = vmatpush1.msra.mxu0 %v207
  %223 = vmatprep.subr.mxu0 0.0
  %224 = vmatpush1.msra.mxu0 %v208
  %225 = vmatprep.subr.mxu0 0.0
  %226 = vmatpush1.msra.mxu0 %v209
  %227 = vmatprep.subr.mxu0 0.0
  %228 = vmatpush1.msra.mxu0 %v210
  %229 = vmatprep.subr.mxu0 0.0
  %230 = vmatpush1.msra.mxu0 0.0
  %231 = vmatprep.subr.mxu0 0.0
  %232 = vmatpush1.msra.mxu0 0.0
  %233 = vmatprep.subr.mxu0 0.0
  %234 = vmatpush1.msra.mxu0 0.0
  %235 = vmatprep.subr.mxu0 0.0
  %236 = vmatpush1.msra.mxu0 0.0
  %237 = vmatprep.subr.mxu0 0.0
  %238 = vmatpush1.msra.mxu0 0.0
  %239 = vmatprep.subr.mxu0 0.0
  %240 = vmatpush1.msra.mxu0 0.0
  %241 = vmatprep.subr.mxu0 0.0
  %242 = vmatpush1.msra.mxu0 0.0
  %243 = vmatprep.subr.mxu0 0.0
  %244 = vmatpush1.msra.mxu0 0.0
  %245 = vmatprep.subr.mxu0 0.0
  %246 = vmatpush1.msra.mxu0 0.0
  %247 = vmatprep.subr.mxu0 0.0
  %248 = vmatpush1.msra.mxu0 0.0
  %249 = vmatprep.subr.mxu0 0.0
  %250 = vmatpush1.msra.mxu0 0.0
  %251 = vmatprep.subr.mxu0 0.0
  %252 = vmatpush1.msra.mxu0 0.0
  %253 = vmatprep.subr.mxu0 0.0
  %254 = vmatpush1.msra.mxu0 0.0
  %255 = vmatprep.subr.mxu0 0.0
  %256 = vmatpush1.msra.mxu0 0.0
  %257 = vmatprep.subr.mxu0 0.0
  %258 = vmatpush1.msra.mxu0 0.0
  %259 = vmatprep.subr.mxu0 0.0
  %260 = vmatpush1.msra.mxu0 0.0
  %261 = vmatprep.subr.mxu0 0.0
  %262 = vmatpush1.msra.mxu0 0.0
  %263 = vmatprep.subr.mxu0 0.0
  %264 = vmatpush1.msra.mxu0 0.0
  %265 = vmatprep.subr.mxu0 0.0
  %266 = vmatpush1.msra.mxu0 0.0
  %267 = vmatprep.subr.mxu0 0.0
  %268 = vmatpush1.msra.mxu0 0.0
  %269 = vmatprep.subr.mxu0 0.0
  %270 = vmatpush1.msra.mxu0 0.0
  %271 = vmatprep.subr.mxu0 0.0
  %272 = vmatpush1.msra.mxu0 0.0
  %273 = vmatprep.subr.mxu0 0.0
  %274 = vmatpush1.msra.mxu0 0.0
  %275 = vmatprep.subr.mxu0 0.0
  %276 = vmatpush1.msra.mxu0 0.0
  %277 = vmatprep.subr.mxu0 0.0
  %278 = vmatpush1.msra.mxu0 0.0
  %279 = vmatprep.subr.mxu0 0.0
  %280 = vmatpush1.msra.mxu0 0.0
  %281 = vmatprep.subr.mxu0 0.0
  %282 = vmatpush1.msra.mxu0 0.0
  %283 = vmatprep.subr.mxu0 0.0
  %284 = vmatpush1.msra.mxu0 0.0
  %285 = vmatprep.mubr.f32.mxu0 0.0
  %286 = vmatmul.mubr.f32.gmra.mrb[0].mxu0 %v216
  %v287 = vpop.f32.mrb[0].mxu0
  %v288 = vadd.f32 %v214, %v287
  %v289 = vpop.f32.mrb[0].mxu0
  %290 = vmatprep.mubr.f32.mxu0 0.0
  %291 = vmatmul.mubr.f32.gmra.mrb[0].mxu0 %v219
  %v292 = vpop.f32.mrb[0].mxu0
  %v293 = vadd.f32 %v214, %v292
  %v294 = vpop.f32.mrb[0].mxu0
  %295 = vdwg.mxu0
  %v296 = vmax.f32 %v288, 0.0
  %v297 = vmax.f32 %v293, 0.0
  %s298 = scalar_lea.vmem %s2, 64
  %v299 = vld [vmem:[%s298] sm:$0xff]
  %v300 = vld [vmem:[%s298 + $0x8] sm:$0xff]
  %v301 = vld [vmem:[%s298 + $0x10] sm:$0xff]
  %v302 = vld [vmem:[%s298 + $0x18] sm:$0xff]
  %v303 = vlaneseq
  %v304 = vshrl.u32 %v303, 7
  %v305 = vsub.s32 0, %v304
  %v306 = vrot.slane %v20, %v305
  %v308 = vsel %vm31, %v296, 0
  %v311 = vsel %vm31, %v297, 0
  %313 = vmatprep.subr.mxu0 0.0
  %314 = vmatpush1.msra.mxu0 %v299
  %315 = vmatprep.subr.mxu0 0.0
  %316 = vmatpush1.msra.mxu0 %v300
  %317 = vmatprep.subr.mxu0 0.0
  %318 = vmatpush1.msra.mxu0 %v301
  %319 = vmatprep.subr.mxu0 0.0
  %320 = vmatpush1.msra.mxu0 %v302
  %321 = vmatprep.subr.mxu0 0.0
  %322 = vmatpush1.msra.mxu0 0.0
  %323 = vmatprep.subr.mxu0 0.0
  %324 = vmatpush1.msra.mxu0 0.0
  %325 = vmatprep.subr.mxu0 0.0
  %326 = vmatpush1.msra.mxu0 0.0
  %327 = vmatprep.subr.mxu0 0.0
  %328 = vmatpush1.msra.mxu0 0.0
  %329 = vmatprep.subr.mxu0 0.0
  %330 = vmatpush1.msra.mxu0 0.0
  %331 = vmatprep.subr.mxu0 0.0
  %332 = vmatpush1.msra.mxu0 0.0
  %333 = vmatprep.subr.mxu0 0.0
  %334 = vmatpush1.msra.mxu0 0.0
  %335 = vmatprep.subr.mxu0 0.0
  %336 = vmatpush1.msra.mxu0 0.0
  %337 = vmatprep.subr.mxu0 0.0
  %338 = vmatpush1.msra.mxu0 0.0
  %339 = vmatprep.subr.mxu0 0.0
  %340 = vmatpush1.msra.mxu0 0.0
  %341 = vmatprep.subr.mxu0 0.0
  %342 = vmatpush1.msra.mxu0 0.0
  %343 = vmatprep.subr.mxu0 0.0
  %344 = vmatpush1.msra.mxu0 0.0
  %345 = vmatprep.subr.mxu0 0.0
  %346 = vmatpush1.msra.mxu0 0.0
  %347 = vmatprep.subr.mxu0 0.0
  %348 = vmatpush1.msra.mxu0 0.0
  %349 = vmatprep.subr.mxu0 0.0
  %350 = vmatpush1.msra.mxu0 0.0
  %351 = vmatprep.subr.mxu0 0.0
  %352 = vmatpush1.msra.mxu0 0.0
  %353 = vmatprep.subr.mxu0 0.0
  %354 = vmatpush1.msra.mxu0 0.0
  %355 = vmatprep.subr.mxu0 0.0
  %356 = vmatpush1.msra.mxu0 0.0
  %357 = vmatprep.subr.mxu0 0.0
  %358 = vmatpush1.msra.mxu0 0.0
  %359 = vmatprep.subr.mxu0 0.0
  %360 = vmatpush1.msra.mxu0 0.0
  %361 = vmatprep.subr.mxu0 0.0
  %362 = vmatpush1.msra.mxu0 0.0
  %363 = vmatprep.subr.mxu0 0.0
  %364 = vmatpush1.msra.mxu0 0.0
  %365 = vmatprep.subr.mxu0 0.0
  %366 = vmatpush1.msra.mxu0 0.0
  %367 = vmatprep.subr.mxu0 0.0
  %368 = vmatpush1.msra.mxu0 0.0
  %369 = vmatprep.subr.mxu0 0.0
  %370 = vmatpush1.msra.mxu0 0.0
  %371 = vmatprep.subr.mxu0 0.0
  %372 = vmatpush1.msra.mxu0 0.0
  %373 = vmatprep.subr.mxu0 0.0
  %374 = vmatpush1.msra.mxu0 0.0
  %375 = vmatprep.subr.mxu0 0.0
  %376 = vmatpush1.msra.mxu0 0.0
  %377 = vmatprep.mubr.f32.mxu0 0.0
  %378 = vmatmul.mubr.f32.gmra.mrb[0].mxu0 %v308
  %v379 = vpop.f32.mrb[0].mxu0
  %v380 = vadd.f32 %v306, %v379
  %v381 = vpop.f32.mrb[0].mxu0
  %382 = vmatprep.mubr.f32.mxu0 0.0
  %383 = vmatmul.mubr.f32.gmra.mrb[0].mxu0 %v311
  %v384 = vpop.f32.mrb[0].mxu0
  %v385 = vadd.f32 %v306, %v384
  %v386 = vpop.f32.mrb[0].mxu0
  %387 = vdwg.mxu0
  %vm388 = vcmask 15360
  %389 = vst.msk [vmem:[%s4] sm:$0xff] %vm388, %v380
  %390 = vst.msk [vmem:[%s4 + $0x8] sm:$0xff] %vm388, %v385
  // Predicated region
  $region18: #{model02_forward.1} parent=0 // pred_check
    _
  $region19: #{model02_forward.1} parent=0 // pred_check_branch
    %392 = sbr.rel (0) target = $region21
  $region20: #{model02_forward.1} parent=0 // pred_region
    _
  $region21: #{model02_forward.1} parent=0 // pred_fallthru
    _
  // Predicated region
  $region22: #{model02_forward.1} parent=0 // pred_check
    _
  $region23: #{model02_forward.1} parent=0 // pred_check_branch
    %394 = sbr.rel (0) target = $region25
  $region24: #{model02_forward.1} parent=0 // pred_region
    _
  $region25: #{model02_forward.1} parent=0 // pred_fallthru
    _

</llo_original>
